<compile_context>
chip_gen: v5e
topology: v5e:2x2
jax: 0.10.0
libtpu: 0.0.40
codegen_flags: <defaults>
</compile_context>

<pallas_src>
import jax
import jax.numpy as jnp
from jax.experimental import pallas as pl
from jax.experimental.pallas import tpu as pltpu


# --------------------------------------------------------------------------- #
# Kernels
# --------------------------------------------------------------------------- #
def _segmented_kernel(u_ref, i_ref, seg_ref, out_ref):
    # u_ref / i_ref : (R_blk, 128) fully lane-dense tiles; each 128-lane row
    #                 packs S = 128 // D consecutive batch elements.
    # seg_ref       : (128, 128) 0/1 segment-sum matrix (constant block index,
    #                 so it is DMA'd once and stays resident).
    # out_ref       : (R_blk, S); row-major order == batch order.
    prod = u_ref[...] * i_ref[...]                          # VPU elementwise
    s = out_ref.shape[1]
    # Segment sums on the (otherwise idle) MXU; HIGHEST => f32-accurate.
    scores = jnp.dot(prod, seg_ref[...],
                     preferred_element_type=jnp.float32,
                     precision=jax.lax.Precision.HIGHEST)   # (R_blk, 128)
    out_ref[...] = jax.nn.sigmoid(scores[:, :s]).astype(out_ref.dtype)


def _rowwise_kernel(u_ref, i_ref, out_ref):
    # u_ref / i_ref : (TB, D) tiles, D on lanes (used when D is not a divisor
    #                 of 128, e.g. D % 128 == 0).
    # out_ref       : (TB, 1)
    # TODO(synk): relayout the scores into a lane-dense (TB//128, 128) block;
    # left as a (TB, 1) column because the required sublane->lane reshape is
    # not reliably lowered by Mosaic and output bytes are <1% of input traffic.
    prod = u_ref[...] * i_ref[...]
    scores = jnp.sum(prod, axis=1, keepdims=True)           # XLU lane reduce
    out_ref[...] = jax.nn.sigmoid(scores).astype(out_ref.dtype)


# --------------------------------------------------------------------------- #
# Tiling helpers
# --------------------------------------------------------------------------- #
_ALIGN = 128  # batch-tile alignment (keeps lane/sublane block constraints)


def _vmem_budget_bytes():
    """(input-tile budget, scoped vmem limit), sized per TPU generation.

    Conservative defaults fit v7x (64 MiB physical / 32 MiB scoped VMEM);
    parts with 128 MiB VMEM (v5e / v6e) get a larger budget and limit.
    """
    tile_budget = 12 * 1024 * 1024
    vmem_limit = 32 * 1024 * 1024
    try:
        cap = getattr(pltpu.get_tpu_info(), "vmem_capacity_bytes", None)
        if cap is not None and cap >= 128 * 1024 * 1024:
            tile_budget = 24 * 1024 * 1024
            vmem_limit = 64 * 1024 * 1024
    except Exception:
        pass
    return tile_budget, vmem_limit


def _pick_batch_tile(batch, bytes_per_row, tile_budget, tb):
    """Budget-limited batch tile; >= 2 grid steps when the batch allows."""
    # 2 inputs x 2 pipeline buffers per input tile must fit the budget.
    tb_budget = max(_ALIGN,
                    (tile_budget // (4 * bytes_per_row)) // _ALIGN * _ALIGN)
    if tb is None:
        tb_cap = tb_budget
    else:
        tb_cap = max(_ALIGN, min(tb_budget, (tb // _ALIGN) * _ALIGN))
    b_ceil = pl.cdiv(batch, _ALIGN) * _ALIGN
    n_steps = pl.cdiv(b_ceil, tb_cap)
    if b_ceil >= 2 * _ALIGN:
        n_steps = max(n_steps, 2)        # give both v7x TensorCores work
    tb_eff = min(tb_cap, pl.cdiv(pl.cdiv(b_ceil, n_steps), _ALIGN) * _ALIGN)
    b_pad = pl.cdiv(batch, tb_eff) * tb_eff
    return tb_eff, b_pad


# --------------------------------------------------------------------------- #
# Forward wrapper
# --------------------------------------------------------------------------- #
def puremf_forward(user_table, item_table, users, items, *, tb=None):
    """PureMF.forward: sigmoid(sum(user_emb * item_emb, axis=-1)).

    user_table: (num_users, D) float32 embedding table
    item_table: (num_items, D) float32 embedding table
    users, items: (B,) int32 indices
    returns: (B,) float32
    """
    assert users.shape == items.shape and users.ndim == 1
    B = users.shape[0]
    D = user_table.shape[1]
    assert item_table.shape[1] == D

    tile_budget, vmem_limit = _vmem_budget_bytes()
    lane_dense = (128 % D == 0) and (D >= 8)

    # VMEM bytes per batch element per input tile (rows lane-padded to 128 on
    # the row-wise path).
    if lane_dense:
        bytes_per_row = D * 4
    else:
        bytes_per_row = pl.cdiv(D, 128) * 128 * 4

    tb_eff, b_pad = _pick_batch_tile(B, bytes_per_row, tile_budget, tb)
    grid = (b_pad // tb_eff,)
    pad = b_pad - B

    # Pad the cheap int32 index vectors, NOT the gathered float activations.
    users_p = jnp.pad(users, (0, pad)) if pad else users
    items_p = jnp.pad(items, (0, pad)) if pad else items

    # Row-major gathers; no wrapper transpose (single HBM pass, fusable).
    # TODO(synk): if allow_input_fusion does not fuse the gathers, an in-kernel
    # gather from a VMEM-resident table would cut the extra materialization.
    users_emb = jnp.take(user_table, users_p, axis=0)        # (b_pad, D)
    items_emb = jnp.take(item_table, items_p, axis=0)        # (b_pad, D)

    if lane_dense:
        S = 128 // D                    # batch elements per 128-lane row
        R_total = b_pad // S
        R_blk = tb_eff // S
        # Free row-major reshape -> fully lane-dense operands (no extra pass).
        users_emb = users_emb.reshape(R_total, 128)
        items_emb = items_emb.reshape(R_total, 128)
        # (128, 128) 0/1 segment matrix: column s sums lanes [s*D, (s+1)*D);
        # columns >= S are all zero (padding to a native MXU shape is free).
        lane = jnp.arange(128)[:, None]
        col = jnp.arange(128)[None, :]
        seg_mat = ((lane // D) == col).astype(jnp.float32)

        out = pl.pallas_call(
            _segmented_kernel,
            out_shape=jax.ShapeDtypeStruct((R_total, S), jnp.float32),
            grid_spec=pltpu.PrefetchScalarGridSpec(
                num_scalar_prefetch=0,
                grid=grid,
                in_specs=[
                    pl.BlockSpec((R_blk, 128), lambda i: (i, 0)),
                    pl.BlockSpec((R_blk, 128), lambda i: (i, 0)),
                    pl.BlockSpec((128, 128), lambda i: (0, 0)),
                ],
                out_specs=pl.BlockSpec((R_blk, S), lambda i: (i, 0)),
            ),
            compiler_params=pltpu.CompilerParams(
                dimension_semantics=("parallel",),
                allow_input_fusion=[True, True, False],
                vmem_limit_bytes=vmem_limit,
            ),
        )(users_emb, items_emb, seg_mat)
        # (R_total, S) row-major == batch order.
        return out.reshape(-1)[:B]

    # General D (including D % 128 == 0): natural (B, D) row layout.
    out = pl.pallas_call(
        _rowwise_kernel,
        out_shape=jax.ShapeDtypeStruct((b_pad, 1), jnp.float32),
        grid_spec=pltpu.PrefetchScalarGridSpec(
            num_scalar_prefetch=0,
            grid=grid,
            in_specs=[
                pl.BlockSpec((tb_eff, D), lambda i: (i, 0)),
                pl.BlockSpec((tb_eff, D), lambda i: (i, 0)),
            ],
            out_specs=pl.BlockSpec((tb_eff, 1), lambda i: (i, 0)),
        ),
        compiler_params=pltpu.CompilerParams(
            dimension_semantics=("parallel",),
            allow_input_fusion=[True, True],
            vmem_limit_bytes=vmem_limit,
        ),
    )(users_emb, items_emb)
    return out[:B, 0]


def _reference_forward(user_table, item_table, users, items):
    ue = jnp.take(user_table, users, axis=0)
    ie = jnp.take(item_table, items, axis=0)
    return jax.nn.sigmoid(jnp.sum(ue * ie, axis=1))


if __name__ == "__main__":
    key = jax.random.PRNGKey(0)

    # Case 1: small latent dim (typical PureMF config) -> lane-dense segmented
    # path; batch deliberately not a multiple of the tile (exercises index
    # padding and a multi-step parallel grid).
    num_users, num_items, latent_dim = 32, 64, 32
    batch = 200
    k_user, k_item, k_u_idx, k_i_idx, key = jax.random.split(key, 5)
    user_table = jax.random.normal(k_user, (num_users, latent_dim), jnp.float32)
    item_table = jax.random.normal(k_item, (num_items, latent_dim), jnp.float32)
    users = jax.random.randint(k_u_idx, (batch,), 0, num_users, jnp.int32)
    items = jax.random.randint(k_i_idx, (batch,), 0, num_items, jnp.int32)

    fwd = jax.jit(puremf_forward)
    scores = fwd(user_table, item_table, users, items)
    jax.block_until_ready(scores)
    ref = _reference_forward(user_table, item_table, users, items)
    assert scores.shape == (batch,)
    assert jnp.allclose(scores, ref, atol=1e-5, rtol=1e-5)

    # Case 2: latent dim a multiple of 128 -> row (dim-on-lanes) layout.
    num_users2, num_items2, latent_dim2 = 48, 40, 128
    batch2 = 100
    k_user2, k_item2, k_u2, k_i2, key = jax.random.split(key, 5)
    user_table2 = jax.random.normal(k_user2, (num_users2, latent_dim2), jnp.float32)
    item_table2 = jax.random.normal(k_item2, (num_items2, latent_dim2), jnp.float32)
    users2 = jax.random.randint(k_u2, (batch2,), 0, num_users2, jnp.int32)
    items2 = jax.random.randint(k_i2, (batch2,), 0, num_items2, jnp.int32)

    scores2 = jax.jit(puremf_forward)(user_table2, item_table2, users2, items2)
    jax.block_until_ready(scores2)
    ref2 = _reference_forward(user_table2, item_table2, users2, items2)
    assert scores2.shape == (batch2,)
    assert jnp.allclose(scores2, ref2, atol=1e-5, rtol=1e-5)

    print("KERNEL_OK")
</pallas_src>

<mosaic_0001>
module attributes {stable_mosaic.version = 11 : i64} {
  func.func @_segmented_kernel(%arg0: i32, %arg1: memref<32x128xf32, #tpu.memory_space<vmem>>, %arg2: memref<32x128xf32, #tpu.memory_space<vmem>>, %arg3: memref<128x128xf32, #tpu.memory_space<vmem>>, %arg4: memref<32x4xf32, #tpu.memory_space<vmem>>) attributes {dimension_semantics = [#tpu.dimension_semantics<parallel>], iteration_bounds = array<i64: 2>, scalar_prefetch = 0 : i64, scratch_operands = 0 : i64, tpu.core_type = #tpu.core_type<tc>, window_params = [{transform_indices = @transform_0, window_bounds = array<i64: 32, 128>}, {transform_indices = @transform_1, window_bounds = array<i64: 32, 128>}, {pipeline_mode = #tpu.pipeline_mode<synchronous>, transform_indices = @transform_2, window_bounds = array<i64: 128, 128>}, {transform_indices = @transform_3, window_bounds = array<i64: 32, 4>}]} {
    %c0 = arith.constant 0 : index
    %c0_0 = arith.constant 0 : index
    %0 = vector.load %arg1[%c0, %c0_0] : memref<32x128xf32, #tpu.memory_space<vmem>>, vector<32x128xf32>
    %c0_1 = arith.constant 0 : index
    %c0_2 = arith.constant 0 : index
    %1 = vector.load %arg2[%c0_1, %c0_2] : memref<32x128xf32, #tpu.memory_space<vmem>>, vector<32x128xf32>
    %2 = arith.mulf %0, %1 : vector<32x128xf32>
    %c0_3 = arith.constant 0 : index
    %c0_4 = arith.constant 0 : index
    %3 = vector.load %arg3[%c0_3, %c0_4] : memref<128x128xf32, #tpu.memory_space<vmem>>, vector<128x128xf32>
    %cst = arith.constant dense<0.000000e+00> : vector<32x128xf32>
    %4 = tpu.matmul %2, %3, %cst {dimension_numbers = #tpu.dot_dimension_numbers<[1], [0], [0], [1], [0, 0, 1, 1], [], []>, precision = #tpu.contract_precision<fp32>} : vector<32x128xf32>, vector<128x128xf32>, vector<32x128xf32> -> vector<32x128xf32>
    %5 = vector.extract_strided_slice %4 {offsets = [0, 0], sizes = [32, 4], strides = [1, 1]} : vector<32x128xf32> to vector<32x4xf32>
    %6 = arith.negf %5 : vector<32x4xf32>
    %7 = math.exp %6 : vector<32x4xf32>
    %cst_5 = arith.constant 1.000000e+00 : f32
    %8 = vector.broadcast %cst_5 : f32 to vector<32x4xf32>
    %9 = arith.addf %8, %7 : vector<32x4xf32>
    %10 = arith.divf %8, %9 : vector<32x4xf32>
    %c0_6 = arith.constant 0 : index
    %c0_7 = arith.constant 0 : index
    %11 = vector.load %arg4[%c0_6, %c0_7] : memref<32x4xf32, #tpu.memory_space<vmem>>, vector<32x4xf32>
    tpu.vector_store %arg4[%c0_6, %c0_7], %10 {strides = array<i32>} : memref<32x4xf32, #tpu.memory_space<vmem>>, vector<32x4xf32>,
    return
  }
  func.func @transform_0(%arg0: i32) -> (i32, i32) {
    %c0_i32 = arith.constant 0 : i32
    %c0_i32_0 = arith.constant 0 : i32
    return %arg0, %c0_i32 : i32, i32
  }
  func.func @transform_1(%arg0: i32) -> (i32, i32) {
    %c0_i32 = arith.constant 0 : i32
    %c0_i32_0 = arith.constant 0 : i32
    return %arg0, %c0_i32 : i32, i32
  }
  func.func @transform_2(%arg0: i32) -> (i32, i32) {
    %c0_i32 = arith.constant 0 : i32
    %c0_i32_0 = arith.constant 0 : i32
    %c0_i32_1 = arith.constant 0 : i32
    return %c0_i32, %c0_i32_0 : i32, i32
  }
  func.func @transform_3(%arg0: i32) -> (i32, i32) {
    %c0_i32 = arith.constant 0 : i32
    %c0_i32_0 = arith.constant 0 : i32
    return %arg0, %c0_i32 : i32, i32
  }
}

</mosaic_0001>

<llo_original>
// kernel: puremf_forward.2
$region0: #{puremf_forward.2}
  #allocation0 [shape = 'u32[]', space=smem, size = 0x4, offset = 0x4, fixed_abs, tag = 'smem constant byte address 0x4 - core index']
  #allocation1 [shape = 'u32[72,128]{1,0:T(1,128)}', space=vmem, size = 0x9000, scoped, tag = 'internal scratch']
  %s0 = inlined_call_operand.vmem [shape: f32[128,128], index: 0, kind: input, shape index: {}]
  %s1 = inlined_call_operand.vmem [shape: pred[64,128], index: 1, kind: input, shape index: {}]
  %s2 = inlined_call_operand.vmem [shape: f32[64,128], index: 2, kind: input, shape index: {}]
  %s3 = inlined_call_operand.vmem [shape: pred[64,128], index: 3, kind: input, shape index: {}]
  %s4 = inlined_call_operand.vmem [shape: f32[64,128], index: 4, kind: input, shape index: {}]
  %s5 = inlined_call_operand.<no memory space> [shape: f32[], index: 5, kind: input, shape index: {}]
  %s6 = inlined_call_operand.vmem [shape: f32[64,4], index: 6, kind: output, shape index: {}]
  %s7 = sld [smem:[#allocation0]]
  $region53: #{puremf_forward.2} parent=0
    _
  %s9 = ssub.s32 1, %s7
  %s10 = scalar_select 0, %s9, %s7
  %v11 = vstv %s5
  %v12 = vstv %s5
  loop: start=0, step=1, limit=4
  $region2: #{puremf_forward.2} parent=0 // loop_pre_header
    _
  $region3: #{puremf_forward.2} parent=0 // loop_header
    %s14 = sphi 0, %s18
    %p15 = scmp.ge.s32.totalorder %s14, 4
    %s24 = sphi 0, %s26
    %s27 = sphi 0, %s24
    %s28 = sphi 0, %s27
    %s44 = sphi 0, %s28
    %s50 = sphi 0, %s52
    %s53 = sphi 0, %s50
    %s54 = sphi 0, %s53
    %s70 = sphi 0, %s54
    %s76 = sphi 0, %s78
    %s79 = sphi 0, %s76
    %s80 = sphi 0, %s79
    %s96 = sphi 0, %s80
    %s102 = sphi 0, %s104
    %s105 = sphi 0, %s102
    %s106 = sphi 0, %s105
    %s122 = sphi 0, %s106
    %s126 = sphi 0, %s126
    %s128 = sphi 0, %s126
    %s129 = sphi 0, %s128
    %s143 = sphi 0, %s129
    %s149 = sphi 0, %s151
    %s152 = sphi 0, %s149
    %s153 = sphi 0, %s152
    %s169 = sphi 0, %s153
  $region4: #{puremf_forward.2} parent=0 // loop_header_branch
    %17 = sbr.rel (%p15) target = $region8
  $region5: #{puremf_forward.2} parent=0 // loop_body
    %s19 = ssub.s32 %s14, 1
    %s20 = ssub.s32 %s14, 2
    %s21 = sadd.s32 %s14, 1
    %s22 = ssub.s32 %s14, %s21
    %p23 = scmp.eq.s32.totalorder %s22, 0
    %s25 = sadd.s32 %s24, 1
    %s26 = scalar_select %p23, %s24, %s25
    %p29 = pneg %p23
    %p30 = scmp.eq.s32.totalorder %s14, 1
    %p31 = por %p29, %p30
    %p32 = scmp.ne.s32.totalorder %s24, %s27
    %p33 = scmp.eq.s32.totalorder %s14, 0
    %p34 = por %p32, %p33
    %p35 = scmp.ne.s32.totalorder %s24, %s27
    %p36 = scmp.eq.s32.totalorder %s19, 1
    %p37 = por %p35, %p36
    %p38 = scmp.ne.s32.totalorder %s27, %s28
    %p39 = scmp.eq.s32.totalorder %s19, 0
    %p40 = por %p38, %p39
    %p41 = scmp.ne.s32.totalorder %s27, %s28
    %p42 = scmp.eq.s32.totalorder %s20, 1
    %p43 = por %p41, %p42
    %p45 = scmp.ne.s32.totalorder %s28, %s44
    %p46 = scmp.eq.s32.totalorder %s20, 0
    %p47 = por %p45, %p46
    %s48 = ssub.s32 %s14, %s21
    %p49 = scmp.eq.s32.totalorder %s48, 0
    %s51 = sadd.s32 %s50, 1
    %s52 = scalar_select %p49, %s50, %s51
    %p55 = pneg %p49
    %p56 = scmp.eq.s32.totalorder %s14, 1
    %p57 = por %p55, %p56
    %p58 = scmp.ne.s32.totalorder %s50, %s53
    %p59 = scmp.eq.s32.totalorder %s14, 0
    %p60 = por %p58, %p59
    %p61 = scmp.ne.s32.totalorder %s50, %s53
    %p62 = scmp.eq.s32.totalorder %s19, 1
    %p63 = por %p61, %p62
    %p64 = scmp.ne.s32.totalorder %s53, %s54
    %p65 = scmp.eq.s32.totalorder %s19, 0
    %p66 = por %p64, %p65
    %p67 = scmp.ne.s32.totalorder %s53, %s54
    %p68 = scmp.eq.s32.totalorder %s20, 1
    %p69 = por %p67, %p68
    %p71 = scmp.ne.s32.totalorder %s54, %s70
    %p72 = scmp.eq.s32.totalorder %s20, 0
    %p73 = por %p71, %p72
    %s74 = ssub.s32 %s14, %s21
    %p75 = scmp.eq.s32.totalorder %s74, 0
    %s77 = sadd.s32 %s76, 1
    %s78 = scalar_select %p75, %s76, %s77
    %p81 = pneg %p75
    %p82 = scmp.eq.s32.totalorder %s14, 1
    %p83 = por %p81, %p82
    %p84 = scmp.ne.s32.totalorder %s76, %s79
    %p85 = scmp.eq.s32.totalorder %s14, 0
    %p86 = por %p84, %p85
    %p87 = scmp.ne.s32.totalorder %s76, %s79
    %p88 = scmp.eq.s32.totalorder %s19, 1
    %p89 = por %p87, %p88
    %p90 = scmp.ne.s32.totalorder %s79, %s80
    %p91 = scmp.eq.s32.totalorder %s19, 0
    %p92 = por %p90, %p91
    %p93 = scmp.ne.s32.totalorder %s79, %s80
    %p94 = scmp.eq.s32.totalorder %s20, 1
    %p95 = por %p93, %p94
    %p97 = scmp.ne.s32.totalorder %s80, %s96
    %p98 = scmp.eq.s32.totalorder %s20, 0
    %p99 = por %p97, %p98
    %s100 = ssub.s32 %s14, %s21
    %p101 = scmp.eq.s32.totalorder %s100, 0
    %s103 = sadd.s32 %s102, 1
    %s104 = scalar_select %p101, %s102, %s103
    %p107 = pneg %p101
    %p108 = scmp.eq.s32.totalorder %s14, 1
    %p109 = por %p107, %p108
    %p110 = scmp.ne.s32.totalorder %s102, %s105
    %p111 = scmp.eq.s32.totalorder %s14, 0
    %p112 = por %p110, %p111
    %p113 = scmp.ne.s32.totalorder %s102, %s105
    %p114 = scmp.eq.s32.totalorder %s19, 1
    %p115 = por %p113, %p114
    %p116 = scmp.ne.s32.totalorder %s105, %s106
    %p117 = scmp.eq.s32.totalorder %s19, 0
    %p118 = por %p116, %p117
    %p119 = scmp.ne.s32.totalorder %s105, %s106
    %p120 = scmp.eq.s32.totalorder %s20, 1
    %p121 = por %p119, %p120
    %p123 = scmp.ne.s32.totalorder %s106, %s122
    %p124 = scmp.eq.s32.totalorder %s20, 0
    %p125 = por %p123, %p124
    %s127 = sadd.s32 %s126, 1
    %p130 = scmp.eq.s32.totalorder %s14, 1
    %p131 = scmp.ne.s32.totalorder %s126, %s128
    %p132 = scmp.eq.s32.totalorder %s14, 0
    %p133 = por %p131, %p132
    %p134 = scmp.ne.s32.totalorder %s126, %s128
    %p135 = scmp.eq.s32.totalorder %s19, 1
    %p136 = por %p134, %p135
    %p137 = scmp.ne.s32.totalorder %s128, %s129
    %p138 = scmp.eq.s32.totalorder %s19, 0
    %p139 = por %p137, %p138
    %p140 = scmp.ne.s32.totalorder %s128, %s129
    %p141 = scmp.eq.s32.totalorder %s20, 1
    %p142 = por %p140, %p141
    %p144 = scmp.ne.s32.totalorder %s129, %s143
    %p145 = scmp.eq.s32.totalorder %s20, 0
    %p146 = por %p144, %p145
    %s147 = ssub.s32 %s14, %s21
    %p148 = scmp.eq.s32.totalorder %s147, 0
    %s150 = sadd.s32 %s149, 1
    %s151 = scalar_select %p148, %s149, %s150
    %p154 = pneg %p148
    %p155 = scmp.eq.s32.totalorder %s14, 1
    %p156 = por %p154, %p155
    %p157 = scmp.ne.s32.totalorder %s149, %s152
    %p158 = scmp.eq.s32.totalorder %s14, 0
    %p159 = por %p157, %p158
    %p160 = scmp.ne.s32.totalorder %s149, %s152
    %p161 = scmp.eq.s32.totalorder %s19, 1
    %p162 = por %p160, %p161
    %p163 = scmp.ne.s32.totalorder %s152, %s153
    %p164 = scmp.eq.s32.totalorder %s19, 0
    %p165 = por %p163, %p164
    %p166 = scmp.ne.s32.totalorder %s152, %s153
    %p167 = scmp.eq.s32.totalorder %s20, 1
    %p168 = por %p166, %p167
    %p170 = scmp.ne.s32.totalorder %s153, %s169
    %p171 = scmp.eq.s32.totalorder %s20, 0
    %p172 = por %p170, %p171
    %p173 = scmp.le.s32.totalorder 1, %s14
    %p174 = scmp.lt.s32.totalorder %s14, 3
    %p175 = pnand %p173, %p174
    %p176 = pneg %p175
    // Predicated region
    $region9: #{puremf_forward.2} parent=5 // pred_check
      _
    $region10: #{puremf_forward.2} parent=5 // pred_check_branch
      %178 = sbr.rel (%p175) target = $region12
    $region11: #{puremf_forward.2} parent=5 // pred_region
      %s179 = ssub.s32 %s14, 1
      // Predicated region
      $region13: #{puremf_forward.2} parent=11 // pred_check
        %p180 = pneg %p139
      $region14: #{puremf_forward.2} parent=11 // pred_check_branch
        %182 = sbr.rel (%p180) target = $region16
      $region15: #{puremf_forward.2} parent=11 // pred_region
        _
      $region16: #{puremf_forward.2} parent=11 // pred_fallthru
        _
    $region12: #{puremf_forward.2} parent=5 // pred_fallthru
      _
    %p183 = scmp.lt.s32.totalorder %s14, 2
    // Predicated region
    $region17: #{puremf_forward.2} parent=5 // pred_check
      %p184 = pneg %p183
    $region18: #{puremf_forward.2} parent=5 // pred_check_branch
      %186 = sbr.rel (%p184) target = $region20
    $region19: #{puremf_forward.2} parent=5 // pred_region
      // Predicated region
      $region21: #{puremf_forward.2} parent=19 // pred_check
        %p187 = pneg %p34
      $region22: #{puremf_forward.2} parent=19 // pred_check_branch
        %189 = sbr.rel (%p187) target = $region24
      $region23: #{puremf_forward.2} parent=19 // pred_region
        %s190 = smul.u32 4, %s14
        %p191 = scmp.lt.s32.totalorder %s190, 7
        %s192 = scalar_select %p191, %s190, 7
        %s193 = smul.addr %s192, 2
        %s194 = scalar_lea.vmem %s3, %s193
        %s195 = smul.u32 4, %s14
      $region24: #{puremf_forward.2} parent=19 // pred_fallthru
        _
      // Predicated region
      $region25: #{puremf_forward.2} parent=19 // pred_check
        %p196 = pneg %p60
      $region26: #{puremf_forward.2} parent=19 // pred_check_branch
        %198 = sbr.rel (%p196) target = $region28
      $region27: #{puremf_forward.2} parent=19 // pred_region
        %s199 = smul.u32 4, %s14
        %p200 = scmp.lt.s32.totalorder %s199, 7
        %s201 = scalar_select %p200, %s199, 7
        %s202 = smul.addr %s201, 8
        %s203 = scalar_lea.vmem %s4, %s202
        %s204 = smul.u32 4, %s14
      $region28: #{puremf_forward.2} parent=19 // pred_fallthru
        _
      // Predicated region
      $region29: #{puremf_forward.2} parent=19 // pred_check
        %p205 = pneg %p86
      $region30: #{puremf_forward.2} parent=19 // pred_check_branch
        %207 = sbr.rel (%p205) target = $region32
      $region31: #{puremf_forward.2} parent=19 // pred_region
        %s208 = smul.u32 4, %s14
        %p209 = scmp.lt.s32.totalorder %s208, 7
        %s210 = scalar_select %p209, %s208, 7
        %s211 = smul.addr %s210, 2
        %s212 = scalar_lea.vmem %s1, %s211
        %s213 = smul.u32 4, %s14
      $region32: #{puremf_forward.2} parent=19 // pred_fallthru
        _
      // Predicated region
      $region33: #{puremf_forward.2} parent=19 // pred_check
        %p214 = pneg %p112
      $region34: #{puremf_forward.2} parent=19 // pred_check_branch
        %216 = sbr.rel (%p214) target = $region36
      $region35: #{puremf_forward.2} parent=19 // pred_region
        %s217 = smul.u32 4, %s14
        %p218 = scmp.lt.s32.totalorder %s217, 7
        %s219 = scalar_select %p218, %s217, 7
        %s220 = smul.addr %s219, 8
        %s221 = scalar_lea.vmem %s2, %s220
        %s222 = smul.u32 4, %s14
      $region36: #{puremf_forward.2} parent=19 // pred_fallthru
        _
    $region20: #{puremf_forward.2} parent=5 // pred_fallthru
      _
    %p223 = scmp.le.s32.totalorder 1, %s14
    %p224 = scmp.lt.s32.totalorder %s14, 3
    %p225 = pnand %p223, %p224
    %p226 = pneg %p225
    // Predicated region
    $region37: #{puremf_forward.2} parent=5 // pred_check
      _
    $region38: #{puremf_forward.2} parent=5 // pred_check_branch
      %228 = sbr.rel (%p225) target = $region40
    $region39: #{puremf_forward.2} parent=5 // pred_region
      #allocation2 [shape = 'u8[16384]{0}', space=vmem, size = 0x4000, dematerialized = true, scoped, tag = 'FusionAdapter Buffer %fusion.3 = f32[64,128]{1,0:T(8,128)} fusion(%param_3.2, %param_4.2, %param_5.1), kind=kLoop, calls=%fused_computation.6.clone, metadata={op_name="jit(puremf_forward)/jit(_take)/select_n" stack_frame_id=3}']
      #allocation3 [shape = 'u8[16384]{0}', space=vmem, size = 0x4000, dematerialized = true, scoped, tag = 'FusionAdapter Buffer %fusion.2 = f32[64,128]{1,0:T(8,128)} fusion(%param_1.15, %param_2.3, %param_5.1), kind=kLoop, calls=%fused_computation.5.clone, metadata={op_name="jit(puremf_forward)/jit(_take)/select_n" stack_frame_id=4}']
      %s229 = ssub.s32 %s14, 1
      %s230 = smul.u32 4, %s19
      %p231 = scmp.lt.s32.totalorder %s230, 7
      %s232 = scalar_select %p231, %s230, 7
      %s233 = smul.addr %s232, 2
      %s234 = scalar_lea.vmem %s3, %s233
      %p235 = pneg %p40
      %p236 = pneg %p37
      %s237 = smul.u32 4, %s19
      %p238 = scmp.lt.s32.totalorder %s237, 7
      %s239 = scalar_select %p238, %s237, 7
      %s240 = smul.addr %s239, 8
      %s241 = scalar_lea.vmem %s4, %s240
      %p242 = pneg %p66
      %p243 = pneg %p63
      %s244 = smul.u32 4, %s19
      %p245 = scmp.lt.s32.totalorder %s244, 7
      %s246 = scalar_select %p245, %s244, 7
      %s247 = smul.addr %s246, 2
      %s248 = scalar_lea.vmem %s1, %s247
      %p249 = pneg %p92
      %p250 = pneg %p89
      %s251 = smul.u32 4, %s19
      %p252 = scmp.lt.s32.totalorder %s251, 7
      %s253 = scalar_select %p252, %s251, 7
      %s254 = smul.addr %s253, 8
      %s255 = scalar_lea.vmem %s2, %s254
      %p256 = pneg %p118
      %p257 = pneg %p115
      %p258 = pneg %p139
      %p259 = pneg %p136
      %p260 = pneg %p165
      %p261 = pneg %p162
      %s262 = smul.u32 4, %s19
      %p263 = scmp.lt.s32.totalorder %s262, 7
      %s264 = scalar_select %p263, %s262, 7
      %s265 = smul.addr %s264, 8
      %s266 = scalar_lea.vmem %s6, %s265
      %s267 = smul.u32 4, %s19
      %p268 = scmp.lt.s32.totalorder %s267, 7
      %s269 = scalar_select %p268, %s267, 7
      %s270 = smul.addr %s269, 2
      %s271 = scalar_lea.vmem %s3, %s270
      %s272 = smul.u32 4, %s19
      %s273 = smul.u32 4, %s19
      %p274 = scmp.lt.s32.totalorder %s273, 7
      %s275 = scalar_select %p274, %s273, 7
      %s276 = smul.addr %s275, 8
      %s277 = scalar_lea.vmem %s4, %s276
      %s278 = smul.u32 4, %s19
      %s279 = smul.u32 4, %s19
      %s280 = smul.u32 4, %s19
      %p281 = scmp.lt.s32.totalorder %s280, 7
      %s282 = scalar_select %p281, %s280, 7
      %s283 = smul.addr %s282, 2
      %s284 = scalar_lea.vmem %s1, %s283
      %s285 = smul.u32 4, %s19
      %s286 = smul.u32 4, %s19
      %p287 = scmp.lt.s32.totalorder %s286, 7
      %s288 = scalar_select %p287, %s286, 7
      %s289 = smul.addr %s288, 8
      %s290 = scalar_lea.vmem %s2, %s289
      %s291 = smul.u32 4, %s19
      %s292 = smul.u32 4, %s19
      %s293 = smul.u32 4, %s19
      %p294 = scmp.lt.s32.totalorder %s293, 7
      %s295 = scalar_select %p294, %s293, 7
      %s296 = smul.addr %s295, 8
      %s297 = scalar_lea.vmem %s6, %s296
      %s298 = smul.u32 4, %s19
      %v299 = vld [vmem:[%s271] sm:$0x3]
      %v300 = vunpack.c.0.s8 %v299
      %v301 = vunpack.c.1.s8 %v299
      %v302 = vunpack.c.2.s8 %v299
      %v303 = vunpack.c.3.s8 %v299
      %v304 = vld [vmem:[%s277] sm:$0xff]
      %305 = xla_tuple %v300, %v304, %v11
      %306 = xla_tuple %305
      %vm307 = vcmp.ne.s32.totalorder %v300, 0
      %v308 = vsel %vm307, %v304, %v11
      %309 = xla_tuple %v308
      %s311 = ssub.s32 256, 1
      %312 = vst [vmem:[#allocation2] sm:%s311] %v308
      %s313 = scalar_lea.vmem %s271, 2
      %v314 = vld [vmem:[%s313] sm:$0x3]
      %v315 = vunpack.c.0.s8 %v314
      %v316 = vunpack.c.1.s8 %v314
      %v317 = vunpack.c.2.s8 %v314
      %v318 = vunpack.c.3.s8 %v314
      %s319 = scalar_lea.vmem %s277, 8
      %v320 = vld [vmem:[%s319] sm:$0xff]
      %321 = xla_tuple %v315, %v320, %v11
      %322 = xla_tuple %321
      %vm323 = vcmp.ne.s32.totalorder %v315, 0
      %v324 = vsel %vm323, %v320, %v11
      %325 = xla_tuple %v324
      %s326 = scalar_lea.vmem [#allocation2], 8
      %s328 = ssub.s32 256, 1
      %329 = vst [vmem:[%s326] sm:%s328] %v324
      %s330 = scalar_lea.vmem %s271, 4
      %v331 = vld [vmem:[%s330] sm:$0x3]
      %v332 = vunpack.c.0.s8 %v331
      %v333 = vunpack.c.1.s8 %v331
      %v334 = vunpack.c.2.s8 %v331
      %v335 = vunpack.c.3.s8 %v331
      %s336 = scalar_lea.vmem %s277, 16
      %v337 = vld [vmem:[%s336] sm:$0xff]
      %338 = xla_tuple %v332, %v337, %v11
      %339 = xla_tuple %338
      %vm340 = vcmp.ne.s32.totalorder %v332, 0
      %v341 = vsel %vm340, %v337, %v11
      %342 = xla_tuple %v341
      %s343 = scalar_lea.vmem [#allocation2], 16
      %s345 = ssub.s32 256, 1
      %346 = vst [vmem:[%s343] sm:%s345] %v341
      %s347 = scalar_lea.vmem %s271, 6
      %v348 = vld [vmem:[%s347] sm:$0x3]
      %v349 = vunpack.c.0.s8 %v348
      %v350 = vunpack.c.1.s8 %v348
      %v351 = vunpack.c.2.s8 %v348
      %v352 = vunpack.c.3.s8 %v348
      %s353 = scalar_lea.vmem %s277, 24
      %v354 = vld [vmem:[%s353] sm:$0xff]
      %355 = xla_tuple %v349, %v354, %v11
      %356 = xla_tuple %355
      %vm357 = vcmp.ne.s32.totalorder %v349, 0
      %v358 = vsel %vm357, %v354, %v11
      %359 = xla_tuple %v358
      %s360 = scalar_lea.vmem [#allocation2], 24
      %s362 = ssub.s32 256, 1
      %363 = vst [vmem:[%s360] sm:%s362] %v358
      %v364 = vld [vmem:[%s284] sm:$0x3]
      %v365 = vunpack.c.0.s8 %v364
      %v366 = vunpack.c.1.s8 %v364
      %v367 = vunpack.c.2.s8 %v364
      %v368 = vunpack.c.3.s8 %v364
      %v369 = vld [vmem:[%s290] sm:$0xff]
      %370 = xla_tuple %v365, %v369, %v12
      %371 = xla_tuple %370
      %vm372 = vcmp.ne.s32.totalorder %v365, 0
      %v373 = vsel %vm372, %v369, %v12
      %374 = xla_tuple %v373
      %s376 = ssub.s32 256, 1
      %377 = vst [vmem:[#allocation3] sm:%s376] %v373
      %s378 = scalar_lea.vmem %s284, 2
      %v379 = vld [vmem:[%s378] sm:$0x3]
      %v380 = vunpack.c.0.s8 %v379
      %v381 = vunpack.c.1.s8 %v379
      %v382 = vunpack.c.2.s8 %v379
      %v383 = vunpack.c.3.s8 %v379
      %s384 = scalar_lea.vmem %s290, 8
      %v385 = vld [vmem:[%s384] sm:$0xff]
      %386 = xla_tuple %v380, %v385, %v12
      %387 = xla_tuple %386
      %vm388 = vcmp.ne.s32.totalorder %v380, 0
      %v389 = vsel %vm388, %v385, %v12
      %390 = xla_tuple %v389
      %s391 = scalar_lea.vmem [#allocation3], 8
      %s393 = ssub.s32 256, 1
      %394 = vst [vmem:[%s391] sm:%s393] %v389
      %s395 = scalar_lea.vmem %s284, 4
      %v396 = vld [vmem:[%s395] sm:$0x3]
      %v397 = vunpack.c.0.s8 %v396
      %v398 = vunpack.c.1.s8 %v396
      %v399 = vunpack.c.2.s8 %v396
      %v400 = vunpack.c.3.s8 %v396
      %s401 = scalar_lea.vmem %s290, 16
      %v402 = vld [vmem:[%s401] sm:$0xff]
      %403 = xla_tuple %v397, %v402, %v12
      %404 = xla_tuple %403
      %vm405 = vcmp.ne.s32.totalorder %v397, 0
      %v406 = vsel %vm405, %v402, %v12
      %407 = xla_tuple %v406
      %s408 = scalar_lea.vmem [#allocation3], 16
      %s410 = ssub.s32 256, 1
      %411 = vst [vmem:[%s408] sm:%s410] %v406
      %s412 = scalar_lea.vmem %s284, 6
      %v413 = vld [vmem:[%s412] sm:$0x3]
      %v414 = vunpack.c.0.s8 %v413
      %v415 = vunpack.c.1.s8 %v413
      %v416 = vunpack.c.2.s8 %v413
      %v417 = vunpack.c.3.s8 %v413
      %s418 = scalar_lea.vmem %s290, 24
      %v419 = vld [vmem:[%s418] sm:$0xff]
      %420 = xla_tuple %v414, %v419, %v12
      %421 = xla_tuple %420
      %vm422 = vcmp.ne.s32.totalorder %v414, 0
      %v423 = vsel %vm422, %v419, %v12
      %424 = xla_tuple %v423
      %s425 = scalar_lea.vmem [#allocation3], 24
      %s427 = ssub.s32 256, 1
      %428 = vst [vmem:[%s425] sm:%s427] %v423
      %v429 = vld [vmem:[#allocation2] sm:$0xff]
      %v430 = vld [vmem:[#allocation2 + $0x8] sm:$0xff]
      %v431 = vld [vmem:[#allocation2 + $0x10] sm:$0xff]
      %v432 = vld [vmem:[#allocation2 + $0x18] sm:$0xff]
      %v433 = vld [vmem:[#allocation3] sm:$0xff]
      %v434 = vld [vmem:[#allocation3 + $0x8] sm:$0xff]
      %v435 = vld [vmem:[#allocation3 + $0x10] sm:$0xff]
      %v436 = vld [vmem:[#allocation3 + $0x18] sm:$0xff]
      %v437 = vmul.f32 %v429, %v433
      %v438 = vmul.f32 %v430, %v434
      %v439 = vmul.f32 %v431, %v435
      %v440 = vmul.f32 %v432, %v436
      %v441 = vld [vmem:[%s0] sm:$0xff]
      %v442 = vld [vmem:[%s0 + $0x8] sm:$0xff]
      %v443 = vld [vmem:[%s0 + $0x10] sm:$0xff]
      %v444 = vld [vmem:[%s0 + $0x18] sm:$0xff]
      %v445 = vld [vmem:[%s0 + $0x20] sm:$0xff]
      %v446 = vld [vmem:[%s0 + $0x28] sm:$0xff]
      %v447 = vld [vmem:[%s0 + $0x30] sm:$0xff]
      %v448 = vld [vmem:[%s0 + $0x38] sm:$0xff]
      %v449 = vld [vmem:[%s0 + $0x40] sm:$0xff]
      %v450 = vld [vmem:[%s0 + $0x48] sm:$0xff]
      %v451 = vld [vmem:[%s0 + $0x50] sm:$0xff]
      %v452 = vld [vmem:[%s0 + $0x58] sm:$0xff]
      %v453 = vld [vmem:[%s0 + $0x60] sm:$0xff]
      %v454 = vld [vmem:[%s0 + $0x68] sm:$0xff]
      %v455 = vld [vmem:[%s0 + $0x70] sm:$0xff]
      %v456 = vld [vmem:[%s0 + $0x78] sm:$0xff]
      %v457 = vand.u32 %v456, 4294901760
      %458 = vmatpush.msra.mxu0 %v457
      %v459 = vand.u32 %v455, 4294901760
      %460 = vmatpush.msra.mxu0 %v459
      %v461 = vand.u32 %v454, 4294901760
      %462 = vmatpush.msra.mxu0 %v461
      %v463 = vand.u32 %v453, 4294901760
      %464 = vmatpush.msra.mxu0 %v463
      %v465 = vand.u32 %v452, 4294901760
      %466 = vmatpush.msra.mxu0 %v465
      %v467 = vand.u32 %v451, 4294901760
      %468 = vmatpush.msra.mxu0 %v467
      %v469 = vand.u32 %v450, 4294901760
      %470 = vmatpush.msra.mxu0 %v469
      %v471 = vand.u32 %v449, 4294901760
      %472 = vmatpush.msra.mxu0 %v471
      %v473 = vand.u32 %v448, 4294901760
      %474 = vmatpush.msra.mxu0 %v473
      %v475 = vand.u32 %v447, 4294901760
      %476 = vmatpush.msra.mxu0 %v475
      %v477 = vand.u32 %v446, 4294901760
      %478 = vmatpush.msra.mxu0 %v477
      %v479 = vand.u32 %v445, 4294901760
      %480 = vmatpush.msra.mxu0 %v479
      %v481 = vand.u32 %v444, 4294901760
      %482 = vmatpush.msra.mxu0 %v481
      %v483 = vand.u32 %v443, 4294901760
      %484 = vmatpush.msra.mxu0 %v483
      %v485 = vand.u32 %v442, 4294901760
      %486 = vmatpush.msra.mxu0 %v485
      %v487 = vand.u32 %v441, 4294901760
      %488 = vmatpush.msra.mxu0 %v487
      %v489 = vand.u32 %v437, 4294901760
      %v490 = vsub.f32 %v437, %v489
      %v491 = vand.u32 %v490, 4294901760
      %v492 = vsub.f32 %v490, %v491
      %v493 = vand.u32 %v492, 4294901760
      %494 = vmatmul.f32.gmra.mxu0 %v493
      %v495 = vpop.f32.mrf.mxu0
      %v496 = vadd.f32 0.0, %v495
      %v497 = vand.u32 %v438, 4294901760
      %v498 = vsub.f32 %v438, %v497
      %v499 = vand.u32 %v498, 4294901760
      %v500 = vsub.f32 %v498, %v499
      %v501 = vand.u32 %v500, 4294901760
      %502 = vmatmul.f32.gmra.mxu0 %v501
      %v503 = vpop.f32.mrf.mxu0
      %v504 = vadd.f32 0.0, %v503
      %v505 = vand.u32 %v439, 4294901760
      %v506 = vsub.f32 %v439, %v505
      %v507 = vand.u32 %v506, 4294901760
      %v508 = vsub.f32 %v506, %v507
      %v509 = vand.u32 %v508, 4294901760
      %510 = vmatmul.f32.gmra.mxu0 %v509
      %v511 = vpop.f32.mrf.mxu0
      %v512 = vadd.f32 0.0, %v511
      %v513 = vand.u32 %v440, 4294901760
      %v514 = vsub.f32 %v440, %v513
      %v515 = vand.u32 %v514, 4294901760
      %v516 = vsub.f32 %v514, %v515
      %v517 = vand.u32 %v516, 4294901760
      %518 = vmatmul.f32.gmra.mxu0 %v517
      %v519 = vpop.f32.mrf.mxu0
      %v520 = vadd.f32 0.0, %v519
      %521 = vdwg.mxu0
      %v522 = vand.u32 %v456, 4294901760
      %v523 = vsub.f32 %v456, %v522
      %v524 = vand.u32 %v523, 4294901760
      %v525 = vsub.f32 %v523, %v524
      %v526 = vand.u32 %v525, 4294901760
      %527 = vmatpush.msra.mxu0 %v526
      %v528 = vand.u32 %v455, 4294901760
      %v529 = vsub.f32 %v455, %v528
      %v530 = vand.u32 %v529, 4294901760
      %v531 = vsub.f32 %v529, %v530
      %v532 = vand.u32 %v531, 4294901760
      %533 = vmatpush.msra.mxu0 %v532
      %v534 = vand.u32 %v454, 4294901760
      %v535 = vsub.f32 %v454, %v534
      %v536 = vand.u32 %v535, 4294901760
      %v537 = vsub.f32 %v535, %v536
      %v538 = vand.u32 %v537, 4294901760
      %539 = vmatpush.msra.mxu0 %v538
      %v540 = vand.u32 %v453, 4294901760
      %v541 = vsub.f32 %v453, %v540
      %v542 = vand.u32 %v541, 4294901760
      %v543 = vsub.f32 %v541, %v542
      %v544 = vand.u32 %v543, 4294901760
      %545 = vmatpush.msra.mxu0 %v544
      %v546 = vand.u32 %v452, 4294901760
      %v547 = vsub.f32 %v452, %v546
      %v548 = vand.u32 %v547, 4294901760
      %v549 = vsub.f32 %v547, %v548
      %v550 = vand.u32 %v549, 4294901760
      %551 = vmatpush.msra.mxu0 %v550
      %v552 = vand.u32 %v451, 4294901760
      %v553 = vsub.f32 %v451, %v552
      %v554 = vand.u32 %v553, 4294901760
      %v555 = vsub.f32 %v553, %v554
      %v556 = vand.u32 %v555, 4294901760
      %557 = vmatpush.msra.mxu0 %v556
      %v558 = vand.u32 %v450, 4294901760
      %v559 = vsub.f32 %v450, %v558
      %v560 = vand.u32 %v559, 4294901760
      %v561 = vsub.f32 %v559, %v560
      %v562 = vand.u32 %v561, 4294901760
      %563 = vmatpush.msra.mxu0 %v562
      %v564 = vand.u32 %v449, 4294901760
      %v565 = vsub.f32 %v449, %v564
      %v566 = vand.u32 %v565, 4294901760
      %v567 = vsub.f32 %v565, %v566
      %v568 = vand.u32 %v567, 4294901760
      %569 = vmatpush.msra.mxu0 %v568
      %v570 = vand.u32 %v448, 4294901760
      %v571 = vsub.f32 %v448, %v570
      %v572 = vand.u32 %v571, 4294901760
      %v573 = vsub.f32 %v571, %v572
      %v574 = vand.u32 %v573, 4294901760
      %575 = vmatpush.msra.mxu0 %v574
      %v576 = vand.u32 %v447, 4294901760
      %v577 = vsub.f32 %v447, %v576
      %v578 = vand.u32 %v577, 4294901760
      %v579 = vsub.f32 %v577, %v578
      %v580 = vand.u32 %v579, 4294901760
      %581 = vmatpush.msra.mxu0 %v580
      %v582 = vand.u32 %v446, 4294901760
      %v583 = vsub.f32 %v446, %v582
      %v584 = vand.u32 %v583, 4294901760
      %v585 = vsub.f32 %v583, %v584
      %v586 = vand.u32 %v585, 4294901760
      %587 = vmatpush.msra.mxu0 %v586
      %v588 = vand.u32 %v445, 4294901760
      %v589 = vsub.f32 %v445, %v588
      %v590 = vand.u32 %v589, 4294901760
      %v591 = vsub.f32 %v589, %v590
      %v592 = vand.u32 %v591, 4294901760
      %593 = vmatpush.msra.mxu0 %v592
      %v594 = vand.u32 %v444, 4294901760
      %v595 = vsub.f32 %v444, %v594
      %v596 = vand.u32 %v595, 4294901760
      %v597 = vsub.f32 %v595, %v596
      %v598 = vand.u32 %v597, 4294901760
      %599 = vmatpush.msra.mxu0 %v598
      %v600 = vand.u32 %v443, 4294901760
      %v601 = vsub.f32 %v443, %v600
      %v602 = vand.u32 %v601, 4294901760
      %v603 = vsub.f32 %v601, %v602
      %v604 = vand.u32 %v603, 4294901760
      %605 = vmatpush.msra.mxu0 %v604
      %v606 = vand.u32 %v442, 4294901760
      %v607 = vsub.f32 %v442, %v606
      %v608 = vand.u32 %v607, 4294901760
      %v609 = vsub.f32 %v607, %v608
      %v610 = vand.u32 %v609, 4294901760
      %611 = vmatpush.msra.mxu0 %v610
      %v612 = vand.u32 %v441, 4294901760
      %v613 = vsub.f32 %v441, %v612
      %v614 = vand.u32 %v613, 4294901760
      %v615 = vsub.f32 %v613, %v614
      %v616 = vand.u32 %v615, 4294901760
      %617 = vmatpush.msra.mxu0 %v616
      %v618 = vand.u32 %v437, 4294901760
      %619 = vmatmul.f32.gmra.mxu0 %v618
      %v620 = vpop.f32.mrf.mxu0
      %v621 = vadd.f32 %v496, %v620
      %v622 = vand.u32 %v438, 4294901760
      %623 = vmatmul.f32.gmra.mxu0 %v622
      %v624 = vpop.f32.mrf.mxu0
      %v625 = vadd.f32 %v504, %v624
      %v626 = vand.u32 %v439, 4294901760
      %627 = vmatmul.f32.gmra.mxu0 %v626
      %v628 = vpop.f32.mrf.mxu0
      %v629 = vadd.f32 %v512, %v628
      %v630 = vand.u32 %v440, 4294901760
      %631 = vmatmul.f32.gmra.mxu0 %v630
      %v632 = vpop.f32.mrf.mxu0
      %v633 = vadd.f32 %v520, %v632
      %634 = vdwg.mxu0
      %v635 = vand.u32 %v456, 4294901760
      %v636 = vsub.f32 %v456, %v635
      %637 = vmatpush.msra.mxu0 %v636
      %v638 = vand.u32 %v455, 4294901760
      %v639 = vsub.f32 %v455, %v638
      %640 = vmatpush.msra.mxu0 %v639
      %v641 = vand.u32 %v454, 4294901760
      %v642 = vsub.f32 %v454, %v641
      %643 = vmatpush.msra.mxu0 %v642
      %v644 = vand.u32 %v453, 4294901760
      %v645 = vsub.f32 %v453, %v644
      %646 = vmatpush.msra.mxu0 %v645
      %v647 = vand.u32 %v452, 4294901760
      %v648 = vsub.f32 %v452, %v647
      %649 = vmatpush.msra.mxu0 %v648
      %v650 = vand.u32 %v451, 4294901760
      %v651 = vsub.f32 %v451, %v650
      %652 = vmatpush.msra.mxu0 %v651
      %v653 = vand.u32 %v450, 4294901760
      %v654 = vsub.f32 %v450, %v653
      %655 = vmatpush.msra.mxu0 %v654
      %v656 = vand.u32 %v449, 4294901760
      %v657 = vsub.f32 %v449, %v656
      %658 = vmatpush.msra.mxu0 %v657
      %v659 = vand.u32 %v448, 4294901760
      %v660 = vsub.f32 %v448, %v659
      %661 = vmatpush.msra.mxu0 %v660
      %v662 = vand.u32 %v447, 4294901760
      %v663 = vsub.f32 %v447, %v662
      %664 = vmatpush.msra.mxu0 %v663
      %v665 = vand.u32 %v446, 4294901760
      %v666 = vsub.f32 %v446, %v665
      %667 = vmatpush.msra.mxu0 %v666
      %v668 = vand.u32 %v445, 4294901760
      %v669 = vsub.f32 %v445, %v668
      %670 = vmatpush.msra.mxu0 %v669
      %v671 = vand.u32 %v444, 4294901760
      %v672 = vsub.f32 %v444, %v671
      %673 = vmatpush.msra.mxu0 %v672
      %v674 = vand.u32 %v443, 4294901760
      %v675 = vsub.f32 %v443, %v674
      %676 = vmatpush.msra.mxu0 %v675
      %v677 = vand.u32 %v442, 4294901760
      %v678 = vsub.f32 %v442, %v677
      %679 = vmatpush.msra.mxu0 %v678
      %v680 = vand.u32 %v441, 4294901760
      %v681 = vsub.f32 %v441, %v680
      %682 = vmatpush.msra.mxu0 %v681
      %v683 = vand.u32 %v437, 4294901760
      %v684 = vsub.f32 %v437, %v683
      %685 = vmatmul.f32.gmra.mxu0 %v684
      %v686 = vpop.f32.mrf.mxu0
      %v687 = vadd.f32 %v621, %v686
      %v688 = vand.u32 %v438, 4294901760
      %v689 = vsub.f32 %v438, %v688
      %690 = vmatmul.f32.gmra.mxu0 %v689
      %v691 = vpop.f32.mrf.mxu0
      %v692 = vadd.f32 %v625, %v691
      %v693 = vand.u32 %v439, 4294901760
      %v694 = vsub.f32 %v439, %v693
      %695 = vmatmul.f32.gmra.mxu0 %v694
      %v696 = vpop.f32.mrf.mxu0
      %v697 = vadd.f32 %v629, %v696
      %v698 = vand.u32 %v440, 4294901760
      %v699 = vsub.f32 %v440, %v698
      %700 = vmatmul.f32.gmra.mxu0 %v699
      %v701 = vpop.f32.mrf.mxu0
      %v702 = vadd.f32 %v633, %v701
      %703 = vdwg.mxu0
      %v704 = vand.u32 %v456, 4294901760
      %705 = vmatpush.msra.mxu0 %v704
      %v706 = vand.u32 %v455, 4294901760
      %707 = vmatpush.msra.mxu0 %v706
      %v708 = vand.u32 %v454, 4294901760
      %709 = vmatpush.msra.mxu0 %v708
      %v710 = vand.u32 %v453, 4294901760
      %711 = vmatpush.msra.mxu0 %v710
      %v712 = vand.u32 %v452, 4294901760
      %713 = vmatpush.msra.mxu0 %v712
      %v714 = vand.u32 %v451, 4294901760
      %715 = vmatpush.msra.mxu0 %v714
      %v716 = vand.u32 %v450, 4294901760
      %717 = vmatpush.msra.mxu0 %v716
      %v718 = vand.u32 %v449, 4294901760
      %719 = vmatpush.msra.mxu0 %v718
      %v720 = vand.u32 %v448, 4294901760
      %721 = vmatpush.msra.mxu0 %v720
      %v722 = vand.u32 %v447, 4294901760
      %723 = vmatpush.msra.mxu0 %v722
      %v724 = vand.u32 %v446, 4294901760
      %725 = vmatpush.msra.mxu0 %v724
      %v726 = vand.u32 %v445, 4294901760
      %727 = vmatpush.msra.mxu0 %v726
      %v728 = vand.u32 %v444, 4294901760
      %729 = vmatpush.msra.mxu0 %v728
      %v730 = vand.u32 %v443, 4294901760
      %731 = vmatpush.msra.mxu0 %v730
      %v732 = vand.u32 %v442, 4294901760
      %733 = vmatpush.msra.mxu0 %v732
      %v734 = vand.u32 %v441, 4294901760
      %735 = vmatpush.msra.mxu0 %v734
      %v736 = vand.u32 %v437, 4294901760
      %v737 = vsub.f32 %v437, %v736
      %v738 = vand.u32 %v737, 4294901760
      %739 = vmatmul.f32.gmra.mxu0 %v738
      %v740 = vpop.f32.mrf.mxu0
      %v741 = vadd.f32 %v687, %v740
      %v742 = vand.u32 %v438, 4294901760
      %v743 = vsub.f32 %v438, %v742
      %v744 = vand.u32 %v743, 4294901760
      %745 = vmatmul.f32.gmra.mxu0 %v744
      %v746 = vpop.f32.mrf.mxu0
      %v747 = vadd.f32 %v692, %v746
      %v748 = vand.u32 %v439, 4294901760
      %v749 = vsub.f32 %v439, %v748
      %v750 = vand.u32 %v749, 4294901760
      %751 = vmatmul.f32.gmra.mxu0 %v750
      %v752 = vpop.f32.mrf.mxu0
      %v753 = vadd.f32 %v697, %v752
      %v754 = vand.u32 %v440, 4294901760
      %v755 = vsub.f32 %v440, %v754
      %v756 = vand.u32 %v755, 4294901760
      %757 = vmatmul.f32.gmra.mxu0 %v756
      %v758 = vpop.f32.mrf.mxu0
      %v759 = vadd.f32 %v702, %v758
      %760 = vdwg.mxu0
      %v761 = vand.u32 %v456, 4294901760
      %v762 = vsub.f32 %v456, %v761
      %v763 = vand.u32 %v762, 4294901760
      %764 = vmatpush.msra.mxu0 %v763
      %v765 = vand.u32 %v455, 4294901760
      %v766 = vsub.f32 %v455, %v765
      %v767 = vand.u32 %v766, 4294901760
      %768 = vmatpush.msra.mxu0 %v767
      %v769 = vand.u32 %v454, 4294901760
      %v770 = vsub.f32 %v454, %v769
      %v771 = vand.u32 %v770, 4294901760
      %772 = vmatpush.msra.mxu0 %v771
      %v773 = vand.u32 %v453, 4294901760
      %v774 = vsub.f32 %v453, %v773
      %v775 = vand.u32 %v774, 4294901760
      %776 = vmatpush.msra.mxu0 %v775
      %v777 = vand.u32 %v452, 4294901760
      %v778 = vsub.f32 %v452, %v777
      %v779 = vand.u32 %v778, 4294901760
      %780 = vmatpush.msra.mxu0 %v779
      %v781 = vand.u32 %v451, 4294901760
      %v782 = vsub.f32 %v451, %v781
      %v783 = vand.u32 %v782, 4294901760
      %784 = vmatpush.msra.mxu0 %v783
      %v785 = vand.u32 %v450, 4294901760
      %v786 = vsub.f32 %v450, %v785
      %v787 = vand.u32 %v786, 4294901760
      %788 = vmatpush.msra.mxu0 %v787
      %v789 = vand.u32 %v449, 4294901760
      %v790 = vsub.f32 %v449, %v789
      %v791 = vand.u32 %v790, 4294901760
      %792 = vmatpush.msra.mxu0 %v791
      %v793 = vand.u32 %v448, 4294901760
      %v794 = vsub.f32 %v448, %v793
      %v795 = vand.u32 %v794, 4294901760
      %796 = vmatpush.msra.mxu0 %v795
      %v797 = vand.u32 %v447, 4294901760
      %v798 = vsub.f32 %v447, %v797
      %v799 = vand.u32 %v798, 4294901760
      %800 = vmatpush.msra.mxu0 %v799
      %v801 = vand.u32 %v446, 4294901760
      %v802 = vsub.f32 %v446, %v801
      %v803 = vand.u32 %v802, 4294901760
      %804 = vmatpush.msra.mxu0 %v803
      %v805 = vand.u32 %v445, 4294901760
      %v806 = vsub.f32 %v445, %v805
      %v807 = vand.u32 %v806, 4294901760
      %808 = vmatpush.msra.mxu0 %v807
      %v809 = vand.u32 %v444, 4294901760
      %v810 = vsub.f32 %v444, %v809
      %v811 = vand.u32 %v810, 4294901760
      %812 = vmatpush.msra.mxu0 %v811
      %v813 = vand.u32 %v443, 4294901760
      %v814 = vsub.f32 %v443, %v813
      %v815 = vand.u32 %v814, 4294901760
      %816 = vmatpush.msra.mxu0 %v815
      %v817 = vand.u32 %v442, 4294901760
      %v818 = vsub.f32 %v442, %v817
      %v819 = vand.u32 %v818, 4294901760
      %820 = vmatpush.msra.mxu0 %v819
      %v821 = vand.u32 %v441, 4294901760
      %v822 = vsub.f32 %v441, %v821
      %v823 = vand.u32 %v822, 4294901760
      %824 = vmatpush.msra.mxu0 %v823
      %v825 = vand.u32 %v437, 4294901760
      %826 = vmatmul.f32.gmra.mxu0 %v825
      %v827 = vpop.f32.mrf.mxu0
      %v828 = vadd.f32 %v741, %v827
      %v829 = vand.u32 %v438, 4294901760
      %830 = vmatmul.f32.gmra.mxu0 %v829
      %v831 = vpop.f32.mrf.mxu0
      %v832 = vadd.f32 %v747, %v831
      %v833 = vand.u32 %v439, 4294901760
      %834 = vmatmul.f32.gmra.mxu0 %v833
      %v835 = vpop.f32.mrf.mxu0
      %v836 = vadd.f32 %v753, %v835
      %v837 = vand.u32 %v440, 4294901760
      %838 = vmatmul.f32.gmra.mxu0 %v837
      %v839 = vpop.f32.mrf.mxu0
      %v840 = vadd.f32 %v759, %v839
      %841 = vdwg.mxu0
      %v842 = vand.u32 %v456, 4294901760
      %843 = vmatpush.msra.mxu0 %v842
      %v844 = vand.u32 %v455, 4294901760
      %845 = vmatpush.msra.mxu0 %v844
      %v846 = vand.u32 %v454, 4294901760
      %847 = vmatpush.msra.mxu0 %v846
      %v848 = vand.u32 %v453, 4294901760
      %849 = vmatpush.msra.mxu0 %v848
      %v850 = vand.u32 %v452, 4294901760
      %851 = vmatpush.msra.mxu0 %v850
      %v852 = vand.u32 %v451, 4294901760
      %853 = vmatpush.msra.mxu0 %v852
      %v854 = vand.u32 %v450, 4294901760
      %855 = vmatpush.msra.mxu0 %v854
      %v856 = vand.u32 %v449, 4294901760
      %857 = vmatpush.msra.mxu0 %v856
      %v858 = vand.u32 %v448, 4294901760
      %859 = vmatpush.msra.mxu0 %v858
      %v860 = vand.u32 %v447, 4294901760
      %861 = vmatpush.msra.mxu0 %v860
      %v862 = vand.u32 %v446, 4294901760
      %863 = vmatpush.msra.mxu0 %v862
      %v864 = vand.u32 %v445, 4294901760
      %865 = vmatpush.msra.mxu0 %v864
      %v866 = vand.u32 %v444, 4294901760
      %867 = vmatpush.msra.mxu0 %v866
      %v868 = vand.u32 %v443, 4294901760
      %869 = vmatpush.msra.mxu0 %v868
      %v870 = vand.u32 %v442, 4294901760
      %871 = vmatpush.msra.mxu0 %v870
      %v872 = vand.u32 %v441, 4294901760
      %873 = vmatpush.msra.mxu0 %v872
      %v874 = vand.u32 %v437, 4294901760
      %875 = vmatmul.f32.gmra.mxu0 %v874
      %v876 = vpop.f32.mrf.mxu0
      %v877 = vadd.f32 %v828, %v876
      %v878 = vand.u32 %v438, 4294901760
      %879 = vmatmul.f32.gmra.mxu0 %v878
      %v880 = vpop.f32.mrf.mxu0
      %v881 = vadd.f32 %v832, %v880
      %v882 = vand.u32 %v439, 4294901760
      %883 = vmatmul.f32.gmra.mxu0 %v882
      %v884 = vpop.f32.mrf.mxu0
      %v885 = vadd.f32 %v836, %v884
      %v886 = vand.u32 %v440, 4294901760
      %887 = vmatmul.f32.gmra.mxu0 %v886
      %v888 = vpop.f32.mrf.mxu0
      %v889 = vadd.f32 %v840, %v888
      %890 = vdwg.mxu0
      %v891 = vxor.u32 %v877, 2147483648
      %v892 = vxor.u32 %v881, 2147483648
      %v893 = vxor.u32 %v885, 2147483648
      %v894 = vxor.u32 %v889, 2147483648
      %v895 = vmul.f32 %v891, 1.442695
      %v896 = vpow.pop %v895
      %v897 = vmul.f32 %v892, 1.442695
      %v898 = vpow.pop %v897
      %v899 = vmul.f32 %v893, 1.442695
      %v900 = vpow.pop %v899
      %v901 = vmul.f32 %v894, 1.442695
      %v902 = vpow.pop %v901
      %v903 = vadd.f32 %v896, 1.0
      %v904 = vadd.f32 %v898, 1.0
      %v905 = vadd.f32 %v900, 1.0
      %v906 = vadd.f32 %v902, 1.0
      %v907 = vrcp.pop %v903
      %v908 = vmul.f32 %v903, %v907
      %v909 = vsub.f32 1.0, %v908
      %v910 = vmul.f32 %v907, %v909
      %v911 = vadd.f32 %v907, %v910
      %vm912 = vweird.f32 %v903
      %vm913 = vweird.f32 %v907
      %vm914 = vmor %vm912, %vm913
      %v915 = vsel %vm914, %v907, %v911
      %v916 = vand.u32 2147483647, %v903
      %vm917 = vcmp.eq.f32.partialorder %v916, 8.507059e+37
      %v918 = vand.u32 %v903, 2147483648
      %v919 = vor.u32 1.1754944e-38, %v918
      %v920 = vsel %vm917, %v919, %v915
      %v921 = vmul.f32 1.0, %v920
      %v922 = vrcp.pop %v904
      %v923 = vmul.f32 %v904, %v922
      %v924 = vsub.f32 1.0, %v923
      %v925 = vmul.f32 %v922, %v924
      %v926 = vadd.f32 %v922, %v925
      %vm927 = vweird.f32 %v904
      %vm928 = vweird.f32 %v922
      %vm929 = vmor %vm927, %vm928
      %v930 = vsel %vm929, %v922, %v926
      %v931 = vand.u32 2147483647, %v904
      %vm932 = vcmp.eq.f32.partialorder %v931, 8.507059e+37
      %v933 = vand.u32 %v904, 2147483648
      %v934 = vor.u32 1.1754944e-38, %v933
      %v935 = vsel %vm932, %v934, %v930
      %v936 = vmul.f32 1.0, %v935
      %v937 = vrcp.pop %v905
      %v938 = vmul.f32 %v905, %v937
      %v939 = vsub.f32 1.0, %v938
      %v940 = vmul.f32 %v937, %v939
      %v941 = vadd.f32 %v937, %v940
      %vm942 = vweird.f32 %v905
      %vm943 = vweird.f32 %v937
      %vm944 = vmor %vm942, %vm943
      %v945 = vsel %vm944, %v937, %v941
      %v946 = vand.u32 2147483647, %v905
      %vm947 = vcmp.eq.f32.partialorder %v946, 8.507059e+37
      %v948 = vand.u32 %v905, 2147483648
      %v949 = vor.u32 1.1754944e-38, %v948
      %v950 = vsel %vm947, %v949, %v945
      %v951 = vmul.f32 1.0, %v950
      %v952 = vrcp.pop %v906
      %v953 = vmul.f32 %v906, %v952
      %v954 = vsub.f32 1.0, %v953
      %v955 = vmul.f32 %v952, %v954
      %v956 = vadd.f32 %v952, %v955
      %vm957 = vweird.f32 %v906
      %vm958 = vweird.f32 %v952
      %vm959 = vmor %vm957, %vm958
      %v960 = vsel %vm959, %v952, %v956
      %v961 = vand.u32 2147483647, %v906
      %vm962 = vcmp.eq.f32.partialorder %v961, 8.507059e+37
      %v963 = vand.u32 %v906, 2147483648
      %v964 = vor.u32 1.1754944e-38, %v963
      %v965 = vsel %vm962, %v964, %v960
      %v966 = vmul.f32 1.0, %v965
      %vm967 = vcmask 31744
      %968 = vst.msk [vmem:[%s297] sm:$0xff] %vm967, %v921
      %969 = vst.msk [vmem:[%s297 + $0x8] sm:$0xff] %vm967, %v936
      %970 = vst.msk [vmem:[%s297 + $0x10] sm:$0xff] %vm967, %v951
      %971 = vst.msk [vmem:[%s297 + $0x18] sm:$0xff] %vm967, %v966
      %s972 = smul.u32 4, %s19
      %p973 = scmp.lt.s32.totalorder %s972, 7
      %s974 = scalar_select %p973, %s972, 7
      %s975 = smul.addr %s974, 8
      %s976 = scalar_lea.vmem %s6, %s975
      // Predicated region
      $region41: #{puremf_forward.2} parent=39 // pred_check
        %p977 = pneg %p162
      $region42: #{puremf_forward.2} parent=39 // pred_check_branch
        %979 = sbr.rel (%p977) target = $region44
      $region43: #{puremf_forward.2} parent=39 // pred_region
        %s980 = smul.u32 4, %s19
      $region44: #{puremf_forward.2} parent=39 // pred_fallthru
        _
    $region40: #{puremf_forward.2} parent=5 // pred_fallthru
      _
    %p981 = scmp.le.s32.totalorder 2, %s14
    // Predicated region
    $region45: #{puremf_forward.2} parent=5 // pred_check
      %p982 = pneg %p981
    $region46: #{puremf_forward.2} parent=5 // pred_check_branch
      %984 = sbr.rel (%p982) target = $region48
    $region47: #{puremf_forward.2} parent=5 // pred_region
      %s985 = ssub.s32 %s14, 2
      // Predicated region
      $region49: #{puremf_forward.2} parent=47 // pred_check
        %p986 = pneg %p168
      $region50: #{puremf_forward.2} parent=47 // pred_check_branch
        %988 = sbr.rel (%p986) target = $region52
      $region51: #{puremf_forward.2} parent=47 // pred_region
        %s989 = smul.u32 4, %s20
        %p990 = scmp.lt.s32.totalorder %s989, 7
        %s991 = scalar_select %p990, %s989, 7
        %s992 = smul.addr %s991, 8
        %s993 = scalar_lea.vmem %s6, %s992
      $region52: #{puremf_forward.2} parent=47 // pred_fallthru
        _
    $region48: #{puremf_forward.2} parent=5 // pred_fallthru
      _
  $region6: #{puremf_forward.2} parent=0 // loop_footer
    %s18 = sadd.s32 1, %s14
  $region7: #{puremf_forward.2} parent=0 // loop_footer_branch
    %13 = sbr.rel target = $region3
  $region8: #{puremf_forward.2} parent=0 // loop_exit
    _

</llo_original>
